<compile_context>
chip_gen: v6e
topology: v6e:2x2x1
jax: 0.10.0
libtpu: 0.0.40
codegen_flags: <defaults>
</compile_context>

<pallas_src>
import functools

import jax
import jax.numpy as jnp
from jax import lax
from jax.experimental import pallas as pl
from jax.experimental.pallas import tpu as pltpu


def _round_up(x, m):
    return (x + m - 1) // m * m


def _actor_kernel(x_ref, u_ref, w1_ref, b1_ref, w2_ref, b2_ref, w3_ref, b3_ref,
                  action_ref, logits_ref, *, out_dim):
    """One batch tile: 3-layer MLP -> logits, then Gumbel-max one-hot sample."""
    cdt = w1_ref.dtype  # MXU operand dtype (bf16); accumulation stays f32.

    # --- feedforward_model: Linear -> ReLU -> Linear -> ReLU -> Linear ---
    x = x_ref[...].astype(cdt)
    h = jnp.dot(x, w1_ref[...], preferred_element_type=jnp.float32)
    h = jnp.maximum(h + b1_ref[...].astype(jnp.float32), 0.0)
    h = jnp.dot(h.astype(cdt), w2_ref[...], preferred_element_type=jnp.float32)
    h = jnp.maximum(h + b2_ref[...].astype(jnp.float32), 0.0)
    logits = (jnp.dot(h.astype(cdt), w3_ref[...], preferred_element_type=jnp.float32)
              + b3_ref[...].astype(jnp.float32))
    logits_ref[...] = logits  # lane-dense (out_dim padded to 128) unmasked store

    # --- OneHotCategorical(logits).sample() via the Gumbel-max trick ---
    # Uniform noise comes in precomputed; 24-ish bits of resolution is plenty
    # for RL action sampling.
    u = jnp.clip(u_ref[...], 1e-12, 1.0 - 1e-7)
    gumbel = -jnp.log(-jnp.log(u))                       # EUP transcendentals
    col = lax.broadcasted_iota(jnp.int32, logits.shape, 1)
    valid = col < out_dim                                # mask lane padding
    z = jnp.where(valid, logits + gumbel, -jnp.inf)

    # argmax as max + first-index-of-max (two cheap XLU reductions; ties have
    # probability ~0 with continuous noise).
    zmax = jnp.max(z, axis=-1, keepdims=True)
    idx = jnp.min(jnp.where(z >= zmax, col, z.shape[-1]), axis=-1, keepdims=True)
    action_ref[...] = (col == idx).astype(action_ref.dtype)


def actor_forward(x, params, noise, *, block_b=128):
    """x: [B, in_dim] f32. params: (w1,b1,w2,b2,w3,b3) with weights [in,out].
    noise: [B, out_dim] uniform(0,1) f32.  Returns (one_hot_action, logits)."""
    w1, b1, w2, b2, w3, b3 = params
    B, in_dim = x.shape
    hidden = w1.shape[1]
    out_dim = w3.shape[1]

    out_pad = _round_up(out_dim, 128)           # lane-dense outputs
    tile_b = min(block_b, _round_up(B, 8))      # f32 sublane multiple
    b_pad = _round_up(B, tile_b)

    # Pad batch rows and the final-layer output (lane) dimension.
    xp = x if b_pad == B else jnp.zeros((b_pad, in_dim), x.dtype).at[:B].set(x)
    w3p = jnp.zeros((hidden, out_pad), w3.dtype).at[:, :out_dim].set(w3)
    b3p = jnp.zeros((1, out_pad), jnp.float32).at[0, :out_dim].set(b3.astype(jnp.float32))
    b1r = b1.reshape(1, hidden).astype(jnp.float32)
    b2r = b2.reshape(1, hidden).astype(jnp.float32)
    u = jnp.full((b_pad, out_pad), 0.5, jnp.float32).at[:B, :out_dim].set(
        noise.astype(jnp.float32))

    grid = (b_pad // tile_b,)
    row_spec = lambda cols: pl.BlockSpec((tile_b, cols), lambda i: (i, 0))
    resident = lambda shape: pl.BlockSpec(shape, lambda i: (0, 0))  # weights stay put

    flops = 2 * b_pad * (in_dim * hidden + hidden * hidden + hidden * out_pad)
    bytes_accessed = (
        xp.size * xp.dtype.itemsize + u.size * 4
        + (w1.size + w2.size + w3p.size) * w1.dtype.itemsize
        + (b1r.size + b2r.size + b3p.size) * 4
        + 2 * b_pad * out_pad * 4)

    kernel = functools.partial(_actor_kernel, out_dim=out_dim)
    action_p, logits_p = pl.pallas_call(
        kernel,
        grid=grid,
        in_specs=[
            row_spec(in_dim),                 # x tile
            row_spec(out_pad),                # uniform noise tile
            resident(w1.shape), resident(b1r.shape),
            resident(w2.shape), resident(b2r.shape),
            resident(w3p.shape), resident(b3p.shape),
        ],
        out_specs=[row_spec(out_pad), row_spec(out_pad)],
        out_shape=(
            jax.ShapeDtypeStruct((b_pad, out_pad), jnp.float32),  # one-hot action
            jax.ShapeDtypeStruct((b_pad, out_pad), jnp.float32),  # logits
        ),
        compiler_params=pltpu.CompilerParams(
            dimension_semantics=("parallel",),       # batch axis -> 2 TCs on v7x
            vmem_limit_bytes=32 * 1024 * 1024,       # explicit budget (v7x: 64 MiB phys)
        ),
        cost_estimate=pl.CostEstimate(
            flops=flops,
            transcendentals=2 * b_pad * out_pad,
            bytes_accessed=bytes_accessed,
        ),
    )(xp, u, w1, b1r, w2, b2r, w3p, b3p)

    return action_p[:B, :out_dim], logits_p[:B, :out_dim]


def init_actor_params(key, in_dim, out_dim, hidden_size, param_dtype=jnp.bfloat16):
    """Synthetic init matching nn.Linear shapes (weights stored transposed [in,out]).
    Weights in bf16 (MXU-native), biases in f32."""
    k1, k2, k3, k4, k5, k6 = jax.random.split(key, 6)
    scale = lambda fan_in: 1.0 / jnp.sqrt(fan_in)
    w1 = (jax.random.uniform(k1, (in_dim, hidden_size), jnp.float32, -1, 1) * scale(in_dim)).astype(param_dtype)
    b1 = jax.random.uniform(k2, (hidden_size,), jnp.float32, -1, 1) * scale(in_dim)
    w2 = (jax.random.uniform(k3, (hidden_size, hidden_size), jnp.float32, -1, 1) * scale(hidden_size)).astype(param_dtype)
    b2 = jax.random.uniform(k4, (hidden_size,), jnp.float32, -1, 1) * scale(hidden_size)
    w3 = (jax.random.uniform(k5, (hidden_size, out_dim), jnp.float32, -1, 1) * scale(hidden_size)).astype(param_dtype)
    b3 = jax.random.uniform(k6, (out_dim,), jnp.float32, -1, 1) * scale(hidden_size)
    return (w1, b1, w2, b2, w3, b3)


def _reference_forward(x, params, noise):
    """Pure-JAX mirror of the kernel math (same bf16 matmul operands, f32 accum)."""
    w1, b1, w2, b2, w3, b3 = params
    cdt = w1.dtype
    h = jnp.dot(x.astype(cdt), w1, preferred_element_type=jnp.float32) + b1.astype(jnp.float32)
    h = jnp.maximum(h, 0.0)
    h = jnp.dot(h.astype(cdt), w2, preferred_element_type=jnp.float32) + b2.astype(jnp.float32)
    h = jnp.maximum(h, 0.0)
    logits = jnp.dot(h.astype(cdt), w3, preferred_element_type=jnp.float32) + b3.astype(jnp.float32)

    u = jnp.clip(noise.astype(jnp.float32), 1e-12, 1.0 - 1e-7)
    gumbel = -jnp.log(-jnp.log(u))
    idx = jnp.argmax(logits + gumbel, axis=-1)
    action = jax.nn.one_hot(idx, logits.shape[-1], dtype=jnp.float32)
    return action, logits


if __name__ == "__main__":
    # Small shapes: batch=8, in_dim=32, hidden_size=32, layers=2, out_dim=16 actions.
    B, IN_DIM, HIDDEN, OUT_DIM = 8, 32, 32, 16

    key = jax.random.PRNGKey(0)
    k_x, k_p, k_u = jax.random.split(key, 3)
    x = jax.random.normal(k_x, (B, IN_DIM), dtype=jnp.float32)
    params = init_actor_params(k_p, IN_DIM, OUT_DIM, HIDDEN)
    noise = jax.random.uniform(k_u, (B, OUT_DIM), dtype=jnp.float32)

    action, logits = actor_forward(x, params, noise)
    action = jax.block_until_ready(action)
    logits = jax.block_until_ready(logits)

    ref_action, ref_logits = _reference_forward(x, params, noise)

    assert logits.shape == (B, OUT_DIM) and action.shape == (B, OUT_DIM)
    assert jnp.allclose(logits, ref_logits, atol=2e-2, rtol=2e-2), "logits mismatch"
    assert jnp.all(jnp.sum(action, axis=-1) == 1.0), "action rows are not one-hot"
    assert jnp.all((action == 0.0) | (action == 1.0)), "action is not binary"
    assert jnp.array_equal(jnp.argmax(action, axis=-1),
                           jnp.argmax(ref_action, axis=-1)), "sampled action mismatch"

    print("KERNEL_OK")
</pallas_src>

<mosaic_0001>
module attributes {stable_mosaic.version = 11 : i64} {
  func.func @_actor_kernel(%arg0: i32, %arg1: memref<8x32xf32, #tpu.memory_space<vmem>>, %arg2: memref<8x128xf32, #tpu.memory_space<vmem>>, %arg3: memref<32x32xbf16, #tpu.memory_space<vmem>>, %arg4: memref<1x32xf32, #tpu.memory_space<vmem>>, %arg5: memref<32x32xbf16, #tpu.memory_space<vmem>>, %arg6: memref<1x32xf32, #tpu.memory_space<vmem>>, %arg7: memref<32x128xbf16, #tpu.memory_space<vmem>>, %arg8: memref<1x128xf32, #tpu.memory_space<vmem>>, %arg9: memref<8x128xf32, #tpu.memory_space<vmem>>, %arg10: memref<8x128xf32, #tpu.memory_space<vmem>>) attributes {dimension_semantics = [#tpu.dimension_semantics<parallel>], iteration_bounds = array<i64: 1>, scalar_prefetch = 0 : i64, scratch_operands = 0 : i64, tpu.core_type = #tpu.core_type<tc>, window_params = [{transform_indices = @transform_0, window_bounds = array<i64: 8, 32>}, {transform_indices = @transform_1, window_bounds = array<i64: 8, 128>}, {pipeline_mode = #tpu.pipeline_mode<synchronous>, transform_indices = @transform_2, window_bounds = array<i64: 32, 32>}, {pipeline_mode = #tpu.pipeline_mode<synchronous>, transform_indices = @transform_3, window_bounds = array<i64: 1, 32>}, {pipeline_mode = #tpu.pipeline_mode<synchronous>, transform_indices = @transform_4, window_bounds = array<i64: 32, 32>}, {pipeline_mode = #tpu.pipeline_mode<synchronous>, transform_indices = @transform_5, window_bounds = array<i64: 1, 32>}, {pipeline_mode = #tpu.pipeline_mode<synchronous>, transform_indices = @transform_6, window_bounds = array<i64: 32, 128>}, {pipeline_mode = #tpu.pipeline_mode<synchronous>, transform_indices = @transform_7, window_bounds = array<i64: 1, 128>}, {transform_indices = @transform_8, window_bounds = array<i64: 8, 128>}, {transform_indices = @transform_9, window_bounds = array<i64: 8, 128>}]} {
    %c0 = arith.constant 0 : index
    %c0_0 = arith.constant 0 : index
    %0 = vector.load %arg1[%c0, %c0_0] : memref<8x32xf32, #tpu.memory_space<vmem>>, vector<8x32xf32>
    %1 = arith.truncf %0 : vector<8x32xf32> to vector<8x32xbf16>
    %c0_1 = arith.constant 0 : index
    %c0_2 = arith.constant 0 : index
    %2 = vector.load %arg3[%c0_1, %c0_2] : memref<32x32xbf16, #tpu.memory_space<vmem>>, vector<32x32xbf16>
    %cst = arith.constant dense<0.000000e+00> : vector<8x32xf32>
    %3 = tpu.matmul %1, %2, %cst {dimension_numbers = #tpu.dot_dimension_numbers<[1], [0], [0], [1], [0, 0, 1, 1], [], []>} : vector<8x32xbf16>, vector<32x32xbf16>, vector<8x32xf32> -> vector<8x32xf32>
    %c0_3 = arith.constant 0 : index
    %c0_4 = arith.constant 0 : index
    %4 = vector.load %arg4[%c0_3, %c0_4] : memref<1x32xf32, #tpu.memory_space<vmem>>, vector<1x32xf32>
    %5 = vector.broadcast %4 : vector<1x32xf32> to vector<8x32xf32>
    %6 = arith.addf %3, %5 : vector<8x32xf32>
    %cst_5 = arith.constant 0.000000e+00 : f32
    %7 = vector.broadcast %cst_5 : f32 to vector<8x32xf32>
    %8 = arith.maximumf %6, %7 : vector<8x32xf32>
    %9 = arith.truncf %8 : vector<8x32xf32> to vector<8x32xbf16>
    %c0_6 = arith.constant 0 : index
    %c0_7 = arith.constant 0 : index
    %10 = vector.load %arg5[%c0_6, %c0_7] : memref<32x32xbf16, #tpu.memory_space<vmem>>, vector<32x32xbf16>
    %cst_8 = arith.constant dense<0.000000e+00> : vector<8x32xf32>
    %11 = tpu.matmul %9, %10, %cst_8 {dimension_numbers = #tpu.dot_dimension_numbers<[1], [0], [0], [1], [0, 0, 1, 1], [], []>} : vector<8x32xbf16>, vector<32x32xbf16>, vector<8x32xf32> -> vector<8x32xf32>
    %c0_9 = arith.constant 0 : index
    %c0_10 = arith.constant 0 : index
    %12 = vector.load %arg6[%c0_9, %c0_10] : memref<1x32xf32, #tpu.memory_space<vmem>>, vector<1x32xf32>
    %13 = vector.broadcast %12 : vector<1x32xf32> to vector<8x32xf32>
    %14 = arith.addf %11, %13 : vector<8x32xf32>
    %cst_11 = arith.constant 0.000000e+00 : f32
    %15 = vector.broadcast %cst_11 : f32 to vector<8x32xf32>
    %16 = arith.maximumf %14, %15 : vector<8x32xf32>
    %17 = arith.truncf %16 : vector<8x32xf32> to vector<8x32xbf16>
    %c0_12 = arith.constant 0 : index
    %c0_13 = arith.constant 0 : index
    %18 = vector.load %arg7[%c0_12, %c0_13] : memref<32x128xbf16, #tpu.memory_space<vmem>>, vector<32x128xbf16>
    %cst_14 = arith.constant dense<0.000000e+00> : vector<8x128xf32>
    %19 = tpu.matmul %17, %18, %cst_14 {dimension_numbers = #tpu.dot_dimension_numbers<[1], [0], [0], [1], [0, 0, 1, 1], [], []>} : vector<8x32xbf16>, vector<32x128xbf16>, vector<8x128xf32> -> vector<8x128xf32>
    %c0_15 = arith.constant 0 : index
    %c0_16 = arith.constant 0 : index
    %20 = vector.load %arg8[%c0_15, %c0_16] : memref<1x128xf32, #tpu.memory_space<vmem>>, vector<1x128xf32>
    %21 = vector.broadcast %20 : vector<1x128xf32> to vector<8x128xf32>
    %22 = arith.addf %19, %21 : vector<8x128xf32>
    %c0_17 = arith.constant 0 : index
    %c0_18 = arith.constant 0 : index
    %23 = vector.load %arg10[%c0_17, %c0_18] : memref<8x128xf32, #tpu.memory_space<vmem>>, vector<8x128xf32>
    tpu.vector_store %arg10[%c0_17, %c0_18], %22 {strides = array<i32>} : memref<8x128xf32, #tpu.memory_space<vmem>>, vector<8x128xf32>,
    %c0_19 = arith.constant 0 : index
    %c0_20 = arith.constant 0 : index
    %24 = vector.load %arg2[%c0_19, %c0_20] : memref<8x128xf32, #tpu.memory_space<vmem>>, vector<8x128xf32>
    %cst_21 = arith.constant 9.99999996E-13 : f32
    %cst_22 = arith.constant 0.99999988 : f32
    %25 = vector.broadcast %cst_21 : f32 to vector<8x128xf32>
    %26 = arith.maximumf %25, %24 : vector<8x128xf32>
    %27 = vector.broadcast %cst_22 : f32 to vector<8x128xf32>
    %28 = arith.minimumf %27, %26 : vector<8x128xf32>
    %29 = math.log %28 : vector<8x128xf32>
    %cst_23 = arith.constant 0.000000e+00 : f32
    %30 = vector.broadcast %cst_23 : f32 to vector<8x128xf32>
    %31 = arith.subf %30, %29 : vector<8x128xf32>
    %32 = math.log %31 : vector<8x128xf32>
    %cst_24 = arith.constant 0.000000e+00 : f32
    %33 = vector.broadcast %cst_24 : f32 to vector<8x128xf32>
    %34 = arith.subf %33, %32 : vector<8x128xf32>
    %35 = tpu.iota {dimensions = array<i32: 1>} : vector<8x128xi32>
    %c16_i32 = arith.constant 16 : i32
    %36 = vector.broadcast %c16_i32 : i32 to vector<8x128xi32>
    %37 = arith.cmpi slt, %35, %36 : vector<8x128xi32>
    %38 = arith.addf %22, %34 : vector<8x128xf32>
    %cst_25 = arith.constant 0xFF800000 : f32
    %39 = vector.broadcast %cst_25 : f32 to vector<8x128xf32>
    %40 = arith.select %37, %38, %39 : vector<8x128xi1>, vector<8x128xf32>
    %cst_26 = arith.constant dense<0xFF800000> : vector<8xf32>
    %41 = vector.multi_reduction <maximumf>, %40, %cst_26 [1] : vector<8x128xf32> to vector<8xf32>
    %42 = vector.shape_cast %41 : vector<8xf32> to vector<8x1xf32>
    %43 = vector.broadcast %42 : vector<8x1xf32> to vector<8x128xf32>
    %44 = arith.cmpf oge, %40, %43 : vector<8x128xf32>
    %c128_i32 = arith.constant 128 : i32
    %45 = vector.broadcast %c128_i32 : i32 to vector<8x128xi32>
    %46 = arith.select %44, %35, %45 : vector<8x128xi1>, vector<8x128xi32>
    %cst_27 = arith.constant dense<2147483647> : vector<8xi32>
    %47 = vector.multi_reduction <minsi>, %46, %cst_27 [1] : vector<8x128xi32> to vector<8xi32>
    %48 = vector.shape_cast %47 : vector<8xi32> to vector<8x1xi32>
    %49 = vector.broadcast %48 : vector<8x1xi32> to vector<8x128xi32>
    %50 = arith.cmpi eq, %35, %49 : vector<8x128xi32>
    %51 = arith.extui %50 : vector<8x128xi1> to vector<8x128xi32>
    %52 = arith.sitofp %51 : vector<8x128xi32> to vector<8x128xf32>
    %c0_28 = arith.constant 0 : index
    %c0_29 = arith.constant 0 : index
    %53 = vector.load %arg9[%c0_28, %c0_29] : memref<8x128xf32, #tpu.memory_space<vmem>>, vector<8x128xf32>
    tpu.vector_store %arg9[%c0_28, %c0_29], %52 {strides = array<i32>} : memref<8x128xf32, #tpu.memory_space<vmem>>, vector<8x128xf32>,
    return
  }
  func.func @transform_0(%arg0: i32) -> (i32, i32) {
    %c0_i32 = arith.constant 0 : i32
    %c0_i32_0 = arith.constant 0 : i32
    return %arg0, %c0_i32 : i32, i32
  }
  func.func @transform_1(%arg0: i32) -> (i32, i32) {
    %c0_i32 = arith.constant 0 : i32
    %c0_i32_0 = arith.constant 0 : i32
    return %arg0, %c0_i32 : i32, i32
  }
  func.func @transform_2(%arg0: i32) -> (i32, i32) {
    %c0_i32 = arith.constant 0 : i32
    %c0_i32_0 = arith.constant 0 : i32
    %c0_i32_1 = arith.constant 0 : i32
    return %c0_i32, %c0_i32_0 : i32, i32
  }
  func.func @transform_3(%arg0: i32) -> (i32, i32) {
    %c0_i32 = arith.constant 0 : i32
    %c0_i32_0 = arith.constant 0 : i32
    %c0_i32_1 = arith.constant 0 : i32
    return %c0_i32, %c0_i32_0 : i32, i32
  }
  func.func @transform_4(%arg0: i32) -> (i32, i32) {
    %c0_i32 = arith.constant 0 : i32
    %c0_i32_0 = arith.constant 0 : i32
    %c0_i32_1 = arith.constant 0 : i32
    return %c0_i32, %c0_i32_0 : i32, i32
  }
  func.func @transform_5(%arg0: i32) -> (i32, i32) {
    %c0_i32 = arith.constant 0 : i32
    %c0_i32_0 = arith.constant 0 : i32
    %c0_i32_1 = arith.constant 0 : i32
    return %c0_i32, %c0_i32_0 : i32, i32
  }
  func.func @transform_6(%arg0: i32) -> (i32, i32) {
    %c0_i32 = arith.constant 0 : i32
    %c0_i32_0 = arith.constant 0 : i32
    %c0_i32_1 = arith.constant 0 : i32
    return %c0_i32, %c0_i32_0 : i32, i32
  }
  func.func @transform_7(%arg0: i32) -> (i32, i32) {
    %c0_i32 = arith.constant 0 : i32
    %c0_i32_0 = arith.constant 0 : i32
    %c0_i32_1 = arith.constant 0 : i32
    return %c0_i32, %c0_i32_0 : i32, i32
  }
  func.func @transform_8(%arg0: i32) -> (i32, i32) {
    %c0_i32 = arith.constant 0 : i32
    %c0_i32_0 = arith.constant 0 : i32
    return %arg0, %c0_i32 : i32, i32
  }
  func.func @transform_9(%arg0: i32) -> (i32, i32) {
    %c0_i32 = arith.constant 0 : i32
    %c0_i32_0 = arith.constant 0 : i32
    return %arg0, %c0_i32 : i32, i32
  }
}

</mosaic_0001>

<llo_original>
// kernel: tpu_custom_call.1
$region0: #{tpu_custom_call.1}
  #allocation0 [shape = 'u32[]', space=smem, size = 0x4, offset = 0x4, fixed_abs, tag = 'smem constant byte address 0x4 - core index']
  #allocation1 [shape = 'u32[144,128]{1,0:T(1,128)}', space=vmem, size = 0x12000, scoped, tag = 'internal scratch']
  %s0 = inlined_call_operand.hbm [shape: f32[8,32], index: 0, kind: input, shape index: {}]
  %s1 = inlined_call_operand.hbm [shape: f32[8,128], index: 1, kind: input, shape index: {}]
  %s2 = inlined_call_operand.hbm [shape: bf16[32,32], index: 2, kind: input, shape index: {}]
  %s3 = inlined_call_operand.vmem [shape: f32[1,32], index: 3, kind: input, shape index: {}]
  %s4 = inlined_call_operand.hbm [shape: bf16[32,32], index: 4, kind: input, shape index: {}]
  %s5 = inlined_call_operand.vmem [shape: f32[1,32], index: 5, kind: input, shape index: {}]
  %s6 = inlined_call_operand.hbm [shape: bf16[32,128], index: 6, kind: input, shape index: {}]
  %s7 = inlined_call_operand.vmem [shape: f32[1,128], index: 7, kind: input, shape index: {}]
  %s8 = inlined_call_operand.hbm [shape: f32[8,128], index: 8, kind: output, shape index: {0}]
  %s9 = inlined_call_operand.hbm [shape: f32[8,128], index: 9, kind: output, shape index: {1}]
  %10 = xla_tuple %s8, %s9
  %s11 = sld [smem:[#allocation0]]
  $region70: #{tpu_custom_call.1} parent=0
    _
  %s13 = ssub.s32 1, %s11
  %s14 = scalar_select 0, %s13, %s11
  $region1: #{tpu_custom_call.1} parent=0
    #allocation2 [shape = 'u8[4096]{0}', space=vmem, size = 0x1000, scoped, tag = 'input window, operand 0, single buffered']
    #allocation3 [shape = 's32[1]{0}', space=sflag, size = 0x4, scoped, tag = 'scoped memory for tpu_custom_call.1']
    #allocation4 [shape = 's32[1]{0}', space=sflag, size = 0x4, scoped, tag = 'scoped memory for tpu_custom_call.1']
    #allocation5 [shape = 'u8[4096]{0}', space=vmem, size = 0x1000, scoped, tag = 'input window, operand 1, single buffered']
    #allocation6 [shape = 's32[1]{0}', space=sflag, size = 0x4, scoped, tag = 'scoped memory for tpu_custom_call.1']
    #allocation7 [shape = 'u8[8192]{0}', space=vmem, size = 0x2000, scoped, tag = 'input window, operand 2, single buffered']
    #allocation8 [shape = 'u8[8192]{0}', space=vmem, size = 0x2000, scoped, tag = 'input window, operand 4, single buffered']
    #allocation9 [shape = 's32[1]{0}', space=sflag, size = 0x4, scoped, tag = 'scoped memory for tpu_custom_call.1']
    #allocation10 [shape = 'u8[8192]{0}', space=vmem, size = 0x2000, scoped, tag = 'input window, operand 6, single buffered']
    #allocation11 [shape = 'u8[4096]{0}', space=vmem, size = 0x1000, scoped, tag = 'output window, operand 0, single buffered']
    #allocation12 [shape = 'u8[4096]{0}', space=vmem, size = 0x1000, scoped, tag = 'output window, operand 1, single buffered']
    #allocation13 [shape = 's32[1]{0}', space=sflag, size = 0x4, scoped, tag = 'scoped memory for tpu_custom_call.1']
    %15 = vsyncpa [#allocation3], 0
    %16 = vsyncpa [#allocation6], 0
    %17 = vsyncpa [#allocation9], 0
    %18 = vsyncpa [#allocation4], 0
    %19 = vsyncpa [#allocation13], 0
    // Predicated region
    $region2: #{tpu_custom_call.1} parent=1 // pred_check
      _
    $region3: #{tpu_custom_call.1} parent=1 // pred_check_branch
      %21 = sbr.rel (0) target = $region5
    $region4: #{tpu_custom_call.1} parent=1 // pred_region
      %s23 = ssub.s32 128, 128
      %24 = vsyncadd [#allocation3], %s23
      %s26 = sshll.u32 [#allocation2], 4
      %s27 = int_to_ptr.vmem [resolvable:$true] %s26
      %29 = dma.hbm_to_vmem [thread:$0]  %s0, 128, %s27, [#allocation3]
    $region5: #{tpu_custom_call.1} parent=1 // pred_fallthru
      _
    // Predicated region
    $region6: #{tpu_custom_call.1} parent=1 // pred_check
      _
    $region7: #{tpu_custom_call.1} parent=1 // pred_check_branch
      %31 = sbr.rel (0) target = $region9
    $region8: #{tpu_custom_call.1} parent=1 // pred_region
      %s33 = ssub.s32 128, 128
      %34 = vsyncadd [#allocation6], %s33
      %s36 = sshll.u32 [#allocation5], 4
      %s37 = int_to_ptr.vmem [resolvable:$true] %s36
      %39 = dma.hbm_to_vmem [thread:$0]  %s1, 128, %s37, [#allocation6]
    $region9: #{tpu_custom_call.1} parent=1 // pred_fallthru
      _
    // Predicated region
    $region10: #{tpu_custom_call.1} parent=1 // pred_check
      _
    $region11: #{tpu_custom_call.1} parent=1 // pred_check_branch
      %41 = sbr.rel (0) target = $region13
    $region12: #{tpu_custom_call.1} parent=1 // pred_region
      %s43 = ssub.s32 256, 256
      %44 = vsyncadd [#allocation6], %s43
      %s45 = sshll.u32 [#allocation7], 4
      %s46 = int_to_ptr.vmem [resolvable:$true] %s45
      %51 = dma.hbm_to_vmem [thread:$0]  %s2, 256, %s46, [#allocation6], 64, 64, 4
    $region13: #{tpu_custom_call.1} parent=1 // pred_fallthru
      _
    // Predicated region
    $region14: #{tpu_custom_call.1} parent=1 // pred_check
      _
    $region15: #{tpu_custom_call.1} parent=1 // pred_check_branch
      %53 = sbr.rel (0) target = $region17
    $region16: #{tpu_custom_call.1} parent=1 // pred_region
      _
    $region17: #{tpu_custom_call.1} parent=1 // pred_fallthru
      _
    // Predicated region
    $region18: #{tpu_custom_call.1} parent=1 // pred_check
      _
    $region19: #{tpu_custom_call.1} parent=1 // pred_check_branch
      %55 = sbr.rel (0) target = $region21
    $region20: #{tpu_custom_call.1} parent=1 // pred_region
      %s57 = ssub.s32 256, 256
      %58 = vsyncadd [#allocation9], %s57
      %s59 = sshll.u32 [#allocation8], 4
      %s60 = int_to_ptr.vmem [resolvable:$true] %s59
      %65 = dma.hbm_to_vmem [thread:$0]  %s4, 256, %s60, [#allocation9], 64, 64, 4
    $region21: #{tpu_custom_call.1} parent=1 // pred_fallthru
      _
    // Predicated region
    $region22: #{tpu_custom_call.1} parent=1 // pred_check
      _
    $region23: #{tpu_custom_call.1} parent=1 // pred_check_branch
      %67 = sbr.rel (0) target = $region25
    $region24: #{tpu_custom_call.1} parent=1 // pred_region
      _
    $region25: #{tpu_custom_call.1} parent=1 // pred_fallthru
      _
    // Predicated region
    $region26: #{tpu_custom_call.1} parent=1 // pred_check
      _
    $region27: #{tpu_custom_call.1} parent=1 // pred_check_branch
      %69 = sbr.rel (0) target = $region29
    $region28: #{tpu_custom_call.1} parent=1 // pred_region
      %s71 = ssub.s32 256, 256
      %72 = vsyncadd [#allocation9], %s71
      %s73 = sshll.u32 [#allocation10], 4
      %s74 = int_to_ptr.vmem [resolvable:$true] %s73
      %79 = dma.hbm_to_vmem [thread:$0]  %s6, 256, %s74, [#allocation9], 64, 64, 4
    $region29: #{tpu_custom_call.1} parent=1 // pred_fallthru
      _
    // Predicated region
    $region30: #{tpu_custom_call.1} parent=1 // pred_check
      _
    $region31: #{tpu_custom_call.1} parent=1 // pred_check_branch
      %81 = sbr.rel (0) target = $region33
    $region32: #{tpu_custom_call.1} parent=1 // pred_region
      _
    $region33: #{tpu_custom_call.1} parent=1 // pred_fallthru
      _
    // Predicated region
    $region34: #{tpu_custom_call.1} parent=1 // pred_check
      _
    $region35: #{tpu_custom_call.1} parent=1 // pred_check_branch
      %83 = sbr.rel (0) target = $region37
    $region36: #{tpu_custom_call.1} parent=1 // pred_region
      %84 = dma.done [#allocation3], 128
    $region37: #{tpu_custom_call.1} parent=1 // pred_fallthru
      _
    // Predicated region
    $region38: #{tpu_custom_call.1} parent=1 // pred_check
      _
    $region39: #{tpu_custom_call.1} parent=1 // pred_check_branch
      %86 = sbr.rel (0) target = $region41
    $region40: #{tpu_custom_call.1} parent=1 // pred_region
      %87 = dma.done [#allocation6], 128
    $region41: #{tpu_custom_call.1} parent=1 // pred_fallthru
      _
    // Predicated region
    $region42: #{tpu_custom_call.1} parent=1 // pred_check
      _
    $region43: #{tpu_custom_call.1} parent=1 // pred_check_branch
      %89 = sbr.rel (0) target = $region45
    $region44: #{tpu_custom_call.1} parent=1 // pred_region
      %90 = dma.done [#allocation6], 256
    $region45: #{tpu_custom_call.1} parent=1 // pred_fallthru
      _
    // Predicated region
    $region46: #{tpu_custom_call.1} parent=1 // pred_check
      _
    $region47: #{tpu_custom_call.1} parent=1 // pred_check_branch
      %92 = sbr.rel (0) target = $region49
    $region48: #{tpu_custom_call.1} parent=1 // pred_region
      %93 = dma.done [#allocation9], 256
    $region49: #{tpu_custom_call.1} parent=1 // pred_fallthru
      _
    // Predicated region
    $region50: #{tpu_custom_call.1} parent=1 // pred_check
      _
    $region51: #{tpu_custom_call.1} parent=1 // pred_check_branch
      %95 = sbr.rel (0) target = $region53
    $region52: #{tpu_custom_call.1} parent=1 // pred_region
      %96 = dma.done [#allocation9], 256
    $region53: #{tpu_custom_call.1} parent=1 // pred_fallthru
      _
    %v98 = vld [vmem:[#allocation2] sm:$0xff]
    %v99 = vpack.c.bf16 %v98, %v98
    %v100 = vld [vmem:[#allocation7] sm:$0xf]
    %v101 = vld [vmem:[#allocation7 + $0x4] sm:$0xf]
    %v102 = vld [vmem:[#allocation7 + $0x8] sm:$0xf]
    %v103 = vld [vmem:[#allocation7 + $0xc] sm:$0xf]
    %v104 = vld [vmem:[%s3] sm:$0x1]
    %v106 = vlaneseq
    %v107 = vshrl.u32 %v106, 7
    %v108 = vsub.s32 0, %v107
    %v109 = vrot.slane %v104, %v108
    %v115 = vunpack.c.l.b16 %v100
    %v116 = vunpack.c.l.b16 %v101
    %v117 = vunpack.c.l.b16 %v102
    %v118 = vunpack.c.l.b16 %v103
    %v119 = vpack.c.b16 %v116, %v115
    %v120 = vpack.c.b16 %v118, %v117
    %vm123 = vcmask 261120
    %v125 = vsel %vm123, %v99, 0
    %127 = vmatprep.subr.bf16.mxu0 0
    %128 = vmatpush1.bf16.msra.mxu0 0
    %129 = vmatprep.subr.bf16.mxu0 0
    %130 = vmatpush1.bf16.msra.mxu0 0
    %131 = vmatprep.subr.bf16.mxu0 0
    %132 = vmatpush1.bf16.msra.mxu0 0
    %133 = vmatprep.subr.bf16.mxu0 0
    %134 = vmatpush1.bf16.msra.mxu0 0
    %135 = vmatprep.subr.bf16.mxu0 0
    %136 = vmatpush1.bf16.msra.mxu0 0
    %137 = vmatprep.subr.bf16.mxu0 0
    %138 = vmatpush1.bf16.msra.mxu0 0
    %139 = vmatprep.subr.bf16.mxu0 0
    %140 = vmatpush1.bf16.msra.mxu0 %v120
    %141 = vmatprep.subr.bf16.mxu0 0
    %142 = vmatpush1.bf16.msra.mxu0 %v119
    %143 = vmatprep.subr.bf16.mxu0 0
    %144 = vmatpush2.bf16.msra.mxu0 0
    %145 = vmatprep.subr.bf16.mxu0 0
    %146 = vmatpush2.bf16.msra.mxu0 0
    %147 = vmatprep.subr.bf16.mxu0 0
    %148 = vmatpush2.bf16.msra.mxu0 0
    %149 = vmatprep.subr.bf16.mxu0 0
    %150 = vmatpush2.bf16.msra.mxu0 0
    %151 = vmatprep.subr.bf16.mxu0 0
    %152 = vmatpush2.bf16.msra.mxu0 0
    %153 = vmatprep.subr.bf16.mxu0 0
    %154 = vmatpush2.bf16.msra.mxu0 0
    %155 = vmatprep.subr.bf16.mxu0 0
    %156 = vmatpush2.bf16.msra.mxu0 0
    %157 = vmatprep.subr.bf16.mxu0 0
    %158 = vmatpush2.bf16.msra.mxu0 0
    %159 = vmatprep.mubr.bf16.mxu0 0
    %160 = vmatmul.mubr.bf16.gmra.mxu0 %v125
    %v161 = vpop.f32.mrf.mxu0
    %v162 = vadd.f32 %v109, %v161
    %v163 = vpop.f32.mrf.mxu0
    %v164 = vpop.f32.mrf.mxu0
    %v165 = vpop.f32.mrf.mxu0
    %166 = vdwg.mxu0
    %v167 = vmax.f32 %v162, 0.0
    %v168 = vpack.c.bf16 %v167, %v167
    %v169 = vld [vmem:[#allocation8] sm:$0xf]
    %v170 = vld [vmem:[#allocation8 + $0x4] sm:$0xf]
    %v171 = vld [vmem:[#allocation8 + $0x8] sm:$0xf]
    %v172 = vld [vmem:[#allocation8 + $0xc] sm:$0xf]
    %v173 = vld [vmem:[%s5] sm:$0x1]
    %v175 = vlaneseq
    %v176 = vshrl.u32 %v175, 7
    %v177 = vsub.s32 0, %v176
    %v178 = vrot.slane %v173, %v177
    %v184 = vunpack.c.l.b16 %v169
    %v185 = vunpack.c.l.b16 %v170
    %v186 = vunpack.c.l.b16 %v171
    %v187 = vunpack.c.l.b16 %v172
    %v188 = vpack.c.b16 %v185, %v184
    %v189 = vpack.c.b16 %v187, %v186
    %v193 = vsel %vm123, %v168, 0
    %195 = vmatprep.subr.bf16.mxu0 0
    %196 = vmatpush1.bf16.msra.mxu0 0
    %197 = vmatprep.subr.bf16.mxu0 0
    %198 = vmatpush1.bf16.msra.mxu0 0
    %199 = vmatprep.subr.bf16.mxu0 0
    %200 = vmatpush1.bf16.msra.mxu0 0
    %201 = vmatprep.subr.bf16.mxu0 0
    %202 = vmatpush1.bf16.msra.mxu0 0
    %203 = vmatprep.subr.bf16.mxu0 0
    %204 = vmatpush1.bf16.msra.mxu0 0
    %205 = vmatprep.subr.bf16.mxu0 0
    %206 = vmatpush1.bf16.msra.mxu0 0
    %207 = vmatprep.subr.bf16.mxu0 0
    %208 = vmatpush1.bf16.msra.mxu0 %v189
    %209 = vmatprep.subr.bf16.mxu0 0
    %210 = vmatpush1.bf16.msra.mxu0 %v188
    %211 = vmatprep.subr.bf16.mxu0 0
    %212 = vmatpush2.bf16.msra.mxu0 0
    %213 = vmatprep.subr.bf16.mxu0 0
    %214 = vmatpush2.bf16.msra.mxu0 0
    %215 = vmatprep.subr.bf16.mxu0 0
    %216 = vmatpush2.bf16.msra.mxu0 0
    %217 = vmatprep.subr.bf16.mxu0 0
    %218 = vmatpush2.bf16.msra.mxu0 0
    %219 = vmatprep.subr.bf16.mxu0 0
    %220 = vmatpush2.bf16.msra.mxu0 0
    %221 = vmatprep.subr.bf16.mxu0 0
    %222 = vmatpush2.bf16.msra.mxu0 0
    %223 = vmatprep.subr.bf16.mxu0 0
    %224 = vmatpush2.bf16.msra.mxu0 0
    %225 = vmatprep.subr.bf16.mxu0 0
    %226 = vmatpush2.bf16.msra.mxu0 0
    %227 = vmatprep.mubr.bf16.mxu0 0
    %228 = vmatmul.mubr.bf16.gmra.mxu0 %v193
    %v229 = vpop.f32.mrf.mxu0
    %v230 = vadd.f32 %v178, %v229
    %v231 = vpop.f32.mrf.mxu0
    %v232 = vpop.f32.mrf.mxu0
    %v233 = vpop.f32.mrf.mxu0
    %234 = vdwg.mxu0
    %v235 = vmax.f32 %v230, 0.0
    %v236 = vpack.c.bf16 %v235, %v235
    %v237 = vld [vmem:[#allocation10] sm:$0xf]
    %v238 = vld [vmem:[#allocation10 + $0x4] sm:$0xf]
    %v239 = vld [vmem:[#allocation10 + $0x8] sm:$0xf]
    %v240 = vld [vmem:[#allocation10 + $0xc] sm:$0xf]
    %v241 = vld [vmem:[%s7] sm:$0x1]
    %v243 = vlaneseq
    %v244 = vshrl.u32 %v243, 7
    %v245 = vsub.s32 0, %v244
    %v246 = vrot.slane %v241, %v245
    %v252 = vunpack.c.l.b16 %v237
    %v253 = vunpack.c.l.b16 %v238
    %v254 = vunpack.c.l.b16 %v239
    %v255 = vunpack.c.l.b16 %v240
    %v256 = vpack.c.b16 %v253, %v252
    %v257 = vpack.c.b16 %v255, %v254
    %v261 = vsel %vm123, %v236, 0
    %263 = vmatprep.subr.bf16.mxu0 0
    %264 = vmatpush1.bf16.msra.mxu0 0
    %265 = vmatprep.subr.bf16.mxu0 0
    %266 = vmatpush1.bf16.msra.mxu0 0
    %267 = vmatprep.subr.bf16.mxu0 0
    %268 = vmatpush1.bf16.msra.mxu0 0
    %269 = vmatprep.subr.bf16.mxu0 0
    %270 = vmatpush1.bf16.msra.mxu0 0
    %271 = vmatprep.subr.bf16.mxu0 0
    %272 = vmatpush1.bf16.msra.mxu0 0
    %273 = vmatprep.subr.bf16.mxu0 0
    %274 = vmatpush1.bf16.msra.mxu0 0
    %275 = vmatprep.subr.bf16.mxu0 0
    %276 = vmatpush1.bf16.msra.mxu0 %v257
    %277 = vmatprep.subr.bf16.mxu0 0
    %278 = vmatpush1.bf16.msra.mxu0 %v256
    %279 = vmatprep.subr.bf16.mxu0 0
    %280 = vmatpush2.bf16.msra.mxu0 0
    %281 = vmatprep.subr.bf16.mxu0 0
    %282 = vmatpush2.bf16.msra.mxu0 0
    %283 = vmatprep.subr.bf16.mxu0 0
    %284 = vmatpush2.bf16.msra.mxu0 0
    %285 = vmatprep.subr.bf16.mxu0 0
    %286 = vmatpush2.bf16.msra.mxu0 0
    %287 = vmatprep.subr.bf16.mxu0 0
    %288 = vmatpush2.bf16.msra.mxu0 0
    %289 = vmatprep.subr.bf16.mxu0 0
    %290 = vmatpush2.bf16.msra.mxu0 0
    %291 = vmatprep.subr.bf16.mxu0 0
    %292 = vmatpush2.bf16.msra.mxu0 0
    %293 = vmatprep.subr.bf16.mxu0 0
    %294 = vmatpush2.bf16.msra.mxu0 0
    %295 = vmatprep.mubr.bf16.mxu0 0
    %296 = vmatmul.mubr.bf16.gmra.mxu0 %v261
    %v297 = vpop.f32.mrf.mxu0
    %v298 = vadd.f32 %v246, %v297
    %v299 = vpop.f32.mrf.mxu0
    %v300 = vpop.f32.mrf.mxu0
    %v301 = vpop.f32.mrf.mxu0
    %302 = vdwg.mxu0
    %303 = vst [vmem:[#allocation12] sm:$0xff] %v298
    %v304 = vld [vmem:[#allocation5] sm:$0xff]
    %v305 = vmax.f32 %v304, 1e-12
    %v306 = vmin.f32 %v305, 0.9999999
    %v307 = vlog2.pop %v306
    %v308 = vmul.f32 %v307, 0.6931472
    %v309 = vsub.f32 0.0, %v308
    %v310 = vlog2.pop %v309
    %v311 = vmul.f32 %v310, 0.6931472
    %v312 = vsub.f32 0.0, %v311
    %v313 = vlaneseq
    %v314 = vand.u32 %v313, 127
    %vm315 = vcmp.lt.s32.totalorder %v314, 16
    %v316 = vadd.f32 %v298, %v312
    %v317 = vsel %vm315, %v316, -inf
    %318 = vmax.xlane.f32.xlu0 %v317
    %v319 = vpop.xlane.xlu0 %318
    %vm320 = vcmp.ge.f32.partialorder %v317, %v319
    %v321 = vsel %vm320, %v314, 128
    %v322 = vand.u32 %v321, 65535
    %v323 = vshra.s32 %v321, 16
    %v324 = vcvt.s32.f32 %v322
    %v325 = vcvt.s32.f32 %v323
    %326 = vmin.xlane.f32.xlu0 %v325
    %v327 = vpop.xlane.xlu0 %326
    %vm328 = vcmp.eq.f32.partialorder %v325, %v327
    %v329 = vsel %vm328, %v324, inf
    %330 = vmin.xlane.f32.xlu0 %v329
    %v331 = vpop.xlane.xlu0 %330
    %v332 = vcvt.f32.s32 %v331
    %v333 = vcvt.f32.s32 %v327
    %v334 = vshll.u32 %v333, 16
    %v335 = vadd.s32 %v334, %v332
    %vm336 = vcmp.eq.s32.totalorder %v314, %v335
    %v337 = vsel %vm336, 1, 0
    %v338 = vcvt.s32.f32 %v337
    %339 = vst [vmem:[#allocation11] sm:$0xff] %v338
    // Predicated region
    $region54: #{tpu_custom_call.1} parent=1 // pred_check
      _
    $region55: #{tpu_custom_call.1} parent=1 // pred_check_branch
      %341 = sbr.rel (0) target = $region57
    $region56: #{tpu_custom_call.1} parent=1 // pred_region
      %s343 = ssub.s32 128, 128
      %344 = vsyncadd [#allocation4], %s343
      %s346 = sshll.u32 [#allocation11], 4
      %s347 = int_to_ptr.vmem [resolvable:$true] %s346
      %349 = dma.vmem_to_hbm [thread:$0]  %s347, 128, %s8, [#allocation4]
    $region57: #{tpu_custom_call.1} parent=1 // pred_fallthru
      _
    // Predicated region
    $region58: #{tpu_custom_call.1} parent=1 // pred_check
      _
    $region59: #{tpu_custom_call.1} parent=1 // pred_check_branch
      %351 = sbr.rel (0) target = $region61
    $region60: #{tpu_custom_call.1} parent=1 // pred_region
      %s353 = ssub.s32 128, 128
      %354 = vsyncadd [#allocation13], %s353
      %s356 = sshll.u32 [#allocation12], 4
      %s357 = int_to_ptr.vmem [resolvable:$true] %s356
      %359 = dma.vmem_to_hbm [thread:$0]  %s357, 128, %s9, [#allocation13]
    $region61: #{tpu_custom_call.1} parent=1 // pred_fallthru
      _
    // Predicated region
    $region62: #{tpu_custom_call.1} parent=1 // pred_check
      _
    $region63: #{tpu_custom_call.1} parent=1 // pred_check_branch
      %361 = sbr.rel (0) target = $region65
    $region64: #{tpu_custom_call.1} parent=1 // pred_region
      %362 = dma.done [#allocation4], 128
    $region65: #{tpu_custom_call.1} parent=1 // pred_fallthru
      _
    // Predicated region
    $region66: #{tpu_custom_call.1} parent=1 // pred_check
      _
    $region67: #{tpu_custom_call.1} parent=1 // pred_check_branch
      %364 = sbr.rel (0) target = $region69
    $region68: #{tpu_custom_call.1} parent=1 // pred_region
      %365 = dma.done [#allocation13], 128
    $region69: #{tpu_custom_call.1} parent=1 // pred_fallthru
      _
    %366 = vsyncpa [#allocation3], 1
    %367 = vsyncpa [#allocation6], 1
    %368 = vsyncpa [#allocation9], 1
    %369 = vsyncpa [#allocation4], 1
    %370 = vsyncpa [#allocation13], 1

</llo_original>
